<compile_context>
chip_gen: v5e
topology: v5e:2x2
jax: 0.10.0
libtpu: 0.0.40
codegen_flags: <defaults>
</compile_context>

<pallas_src>
import math
import functools

import jax
import jax.numpy as jnp
from jax.experimental import pallas as pl
from jax.experimental.pallas import tpu as pltpu


def _round_up(x, m):
    return (x + m - 1) // m * m


def _pick_param_tiles(in_dim, out_dim):
    # Collapse the K / N grid axes whenever the whole padded extent fits in one
    # tile (the common case for this module's shapes); otherwise use tiles that
    # keep the double-buffered working set small.
    tk = _round_up(in_dim, 128) if in_dim <= 2048 else 1024
    tn = _round_up(out_dim, 128) if out_dim <= 512 else 256
    return tn, tk


def prepare_weight_freezing_params(weight, shared_weight, shared_mask, bias,
                                   *, tn=None, tk=None):
    """Pad + cast the parameter-side operands once; cache across forward calls.

    weight:        (out_dim, in_dim) f32   -- PyTorch layout
    shared_weight: (in_dim, out_dim) f32
    shared_mask:   (in_dim, out_dim) bool / int
    bias:          (out_dim,) f32
    """
    out_dim, in_dim = weight.shape
    auto_tn, auto_tk = _pick_param_tiles(in_dim, out_dim)
    tn = tn or auto_tn
    tk = tk or auto_tk
    kp = _round_up(in_dim, tk)
    np_ = _round_up(out_dim, tn)

    pad_w = ((0, kp - in_dim), (0, np_ - out_dim))
    # bf16 weight streams (MXU-native), int8 mask, f32 bias.
    w_t_p = jnp.pad(weight.T, pad_w).astype(jnp.bfloat16)
    shared_p = jnp.pad(shared_weight, pad_w).astype(jnp.bfloat16)
    mask_p = jnp.pad(shared_mask.astype(jnp.int8), pad_w)
    bias_p = jnp.pad(bias.astype(jnp.float32), (0, np_ - out_dim)).reshape(1, np_)

    return dict(w_t=w_t_p, shared=shared_p, mask=mask_p, bias=bias_p,
                in_dim=in_dim, out_dim=out_dim, tn=tn, tk=tk)


def _weight_freezing_kernel(x_ref, w_t_ref, shared_ref, mask_ref, bias_ref,
                            o_ref, *, multiple):
    k = pl.program_id(2)

    # Elementwise select on the VPU (runs once per weight tile per M-tile).
    # Note: on v5e bf16 VPU ops unpack to f32 — negligible at these sizes.
    combined = jnp.where(mask_ref[...] != 0,
                         shared_ref[...] * multiple,
                         w_t_ref[...])
    acc = jnp.dot(x_ref[...].astype(jnp.bfloat16), combined,
                  preferred_element_type=jnp.float32)

    # Output block is resident across k (its index_map ignores k): accumulate
    # directly into o_ref; bias is added exactly once (at k == 0).
    @pl.when(k == 0)
    def _():
        o_ref[...] = acc + bias_ref[...]

    @pl.when(k != 0)
    def _():
        o_ref[...] += acc


def weight_freezing_forward(x, params, multiple, *, tm=None):
    """Fused WeightFreezing forward.

    x:      (rows, in_dim) f32  (stack batch*seq into rows at call site)
    params: dict from prepare_weight_freezing_params (padded/cast, cached)
    Returns (rows, out_dim) f32.
    """
    rows, in_dim = x.shape
    assert in_dim == params["in_dim"]
    out_dim = params["out_dim"]
    tk, tn = params["tk"], params["tn"]
    kp, np_ = params["w_t"].shape

    # Larger tm amortizes the three weight streams and the VPU select across
    # more rows; cap so tiles stay comfortably within VMEM on all generations.
    tm = tm or min(512, _round_up(rows, 128))
    mp = _round_up(rows, tm)

    if mp == rows and kp == in_dim:
        x_p = x
    else:
        x_p = jnp.pad(x, ((0, mp - rows), (0, kp - in_dim)))

    grid = (mp // tm, np_ // tn, kp // tk)
    kernel = functools.partial(_weight_freezing_kernel, multiple=multiple)

    # TODO(synk): if `multiple` ever becomes a traced/learned scalar, pass it
    # through SMEM instead of baking it in as a static Python float.
    out_p = pl.pallas_call(
        kernel,
        out_shape=jax.ShapeDtypeStruct((mp, np_), jnp.float32),
        grid=grid,
        in_specs=[
            pl.BlockSpec((tm, tk), lambda i, j, k: (i, k)),   # x        (f32)
            pl.BlockSpec((tk, tn), lambda i, j, k: (k, j)),   # weight.T (bf16)
            pl.BlockSpec((tk, tn), lambda i, j, k: (k, j)),   # shared   (bf16)
            pl.BlockSpec((tk, tn), lambda i, j, k: (k, j)),   # mask     (int8)
            pl.BlockSpec((1, tn), lambda i, j, k: (0, j)),    # bias     (f32)
        ],
        out_specs=pl.BlockSpec((tm, tn), lambda i, j, k: (i, j)),
        compiler_params=pltpu.CompilerParams(
            # M/N parallel (megacore only helps on v7x when the grid splits),
            # K reduction innermost + arbitrary.
            dimension_semantics=("parallel", "parallel", "arbitrary"),
            # Explicit limit matters on v5e (16 MiB default scoped VMEM) and is
            # safe on v7x (64 MiB physical); tile caps keep us well under it.
            vmem_limit_bytes=32 * 1024 * 1024,
        ),
    )(x_p, params["w_t"], params["shared"], params["mask"], params["bias"])

    if mp == rows and np_ == out_dim:
        return out_p
    return out_p[:rows, :out_dim]


if __name__ == "__main__":
    # Small-but-representative shapes: (batch, seq) rows are stacked into the
    # matmul M dimension so the MXU sees >= 128 rows per call.
    batch, seq = 4, 64                 # stacked rows M = 256
    input_dim, output_dim = 160, 72    # K pads to 256, N pads to 128
    multiple = 2.0
    shared_ratio = 0.3

    key = jax.random.PRNGKey(0)
    k_w, k_b, k_m, k_x, k_sw = jax.random.split(key, 5)

    # kaiming_uniform_(a=sqrt(5)) on (out_dim, in_dim): bound = 1/sqrt(fan_in)
    fan_in = input_dim
    bound = 1.0 / math.sqrt(fan_in)
    weight = jax.random.uniform(k_w, (output_dim, input_dim),
                                minval=-bound, maxval=bound, dtype=jnp.float32)
    bias = jax.random.uniform(k_b, (output_dim,),
                              minval=-bound, maxval=bound, dtype=jnp.float32)
    shared_mask = (jax.random.uniform(k_m, (input_dim, output_dim)) <
                   shared_ratio)

    x = jax.random.normal(k_x, (batch, seq, input_dim), dtype=jnp.float32)
    shared_weight = jax.random.normal(k_sw, (input_dim, output_dim),
                                      dtype=jnp.float32)

    # Parameter-side prep happens ONCE (cache across forward calls).
    params = prepare_weight_freezing_params(weight, shared_weight, shared_mask,
                                            bias)

    x2d = x.reshape(batch * seq, input_dim)         # stack rows for the MXU
    out2d = weight_freezing_forward(x2d, params, multiple)
    out = jax.block_until_ready(out2d.reshape(batch, seq, output_dim))

    # Pure-JAX reference at matched (bf16-operand, f32-accumulate) precision.
    w_t = weight.T
    combined_bf16 = jnp.where(shared_mask,
                              shared_weight.astype(jnp.bfloat16) * multiple,
                              w_t.astype(jnp.bfloat16))
    ref2d = jnp.dot(x2d.astype(jnp.bfloat16), combined_bf16,
                    preferred_element_type=jnp.float32) + bias
    ref = ref2d.reshape(batch, seq, output_dim)

    assert out.shape == (batch, seq, output_dim)
    assert jnp.allclose(out, ref, atol=1e-2, rtol=1e-2)

    print("KERNEL_OK")
</pallas_src>

<mosaic_0001>
module attributes {stable_mosaic.version = 11 : i64} {
  func.func @_weight_freezing_kernel(%arg0: i32, %arg1: i32, %arg2: i32, %arg3: memref<256x256xf32, #tpu.memory_space<vmem>>, %arg4: memref<256x128xbf16, #tpu.memory_space<vmem>>, %arg5: memref<256x128xbf16, #tpu.memory_space<vmem>>, %arg6: memref<256x128xi8, #tpu.memory_space<vmem>>, %arg7: memref<1x128xf32, #tpu.memory_space<vmem>>, %arg8: memref<256x128xf32, #tpu.memory_space<vmem>>) attributes {dimension_semantics = [#tpu.dimension_semantics<parallel>, #tpu.dimension_semantics<parallel>, #tpu.dimension_semantics<arbitrary>], iteration_bounds = array<i64: 1, 1, 1>, scalar_prefetch = 0 : i64, scratch_operands = 0 : i64, tpu.core_type = #tpu.core_type<tc>, window_params = [{transform_indices = @transform_0, window_bounds = array<i64: 256, 256>}, {transform_indices = @transform_1, window_bounds = array<i64: 256, 128>}, {transform_indices = @transform_2, window_bounds = array<i64: 256, 128>}, {transform_indices = @transform_3, window_bounds = array<i64: 256, 128>}, {transform_indices = @transform_4, window_bounds = array<i64: 1, 128>}, {transform_indices = @transform_5, window_bounds = array<i64: 256, 128>}]} {
    %c0 = arith.constant 0 : index
    %c0_0 = arith.constant 0 : index
    %0 = vector.load %arg6[%c0, %c0_0] : memref<256x128xi8, #tpu.memory_space<vmem>>, vector<256x128xi8>
    %c0_i8 = arith.constant 0 : i8
    %1 = vector.broadcast %c0_i8 : i8 to vector<256x128xi8>
    %2 = arith.cmpi ne, %0, %1 : vector<256x128xi8>
    %c0_1 = arith.constant 0 : index
    %c0_2 = arith.constant 0 : index
    %3 = vector.load %arg5[%c0_1, %c0_2] : memref<256x128xbf16, #tpu.memory_space<vmem>>, vector<256x128xbf16>
    %cst = arith.constant 2.000000e+00 : bf16
    %4 = vector.broadcast %cst : bf16 to vector<256x128xbf16>
    %5 = arith.mulf %3, %4 : vector<256x128xbf16>
    %c0_3 = arith.constant 0 : index
    %c0_4 = arith.constant 0 : index
    %6 = vector.load %arg4[%c0_3, %c0_4] : memref<256x128xbf16, #tpu.memory_space<vmem>>, vector<256x128xbf16>
    %7 = arith.select %2, %5, %6 : vector<256x128xi1>, vector<256x128xbf16>
    %c0_5 = arith.constant 0 : index
    %c0_6 = arith.constant 0 : index
    %8 = vector.load %arg3[%c0_5, %c0_6] : memref<256x256xf32, #tpu.memory_space<vmem>>, vector<256x256xf32>
    %9 = arith.truncf %8 : vector<256x256xf32> to vector<256x256xbf16>
    %cst_7 = arith.constant dense<0.000000e+00> : vector<256x128xf32>
    %10 = tpu.matmul %9, %7, %cst_7 {dimension_numbers = #tpu.dot_dimension_numbers<[1], [0], [0], [1], [0, 0, 1, 1], [], []>} : vector<256x256xbf16>, vector<256x128xbf16>, vector<256x128xf32> -> vector<256x128xf32>
    %c0_i32 = arith.constant 0 : i32
    %11 = arith.cmpi eq, %arg2, %c0_i32 : i32
    %12 = arith.extui %11 : i1 to i32
    %c0_i32_8 = arith.constant 0 : i32
    %13 = arith.cmpi ne, %12, %c0_i32_8 : i32
    scf.if %13 {
      %c0_11 = arith.constant 0 : index
      %c0_12 = arith.constant 0 : index
      %17 = vector.load %arg7[%c0_11, %c0_12] : memref<1x128xf32, #tpu.memory_space<vmem>>, vector<1x128xf32>
      %18 = vector.broadcast %17 : vector<1x128xf32> to vector<256x128xf32>
      %19 = arith.addf %10, %18 : vector<256x128xf32>
      %c0_13 = arith.constant 0 : index
      %c0_14 = arith.constant 0 : index
      %20 = vector.load %arg8[%c0_13, %c0_14] : memref<256x128xf32, #tpu.memory_space<vmem>>, vector<256x128xf32>
      tpu.vector_store %arg8[%c0_13, %c0_14], %19 {strides = array<i32>} : memref<256x128xf32, #tpu.memory_space<vmem>>, vector<256x128xf32>,
    } else {
    }
    %c0_i32_9 = arith.constant 0 : i32
    %14 = arith.cmpi ne, %arg2, %c0_i32_9 : i32
    %15 = arith.extui %14 : i1 to i32
    %c0_i32_10 = arith.constant 0 : i32
    %16 = arith.cmpi ne, %15, %c0_i32_10 : i32
    scf.if %16 {
      %c0_11 = arith.constant 0 : index
      %c0_12 = arith.constant 0 : index
      %17 = vector.load %arg8[%c0_11, %c0_12] : memref<256x128xf32, #tpu.memory_space<vmem>>, vector<256x128xf32>
      %18 = arith.addf %17, %10 : vector<256x128xf32>
      %c0_13 = arith.constant 0 : index
      %c0_14 = arith.constant 0 : index
      %19 = vector.load %arg8[%c0_13, %c0_14] : memref<256x128xf32, #tpu.memory_space<vmem>>, vector<256x128xf32>
      tpu.vector_store %arg8[%c0_13, %c0_14], %18 {strides = array<i32>} : memref<256x128xf32, #tpu.memory_space<vmem>>, vector<256x128xf32>,
    } else {
    }
    return
  }
  func.func @transform_0(%arg0: i32, %arg1: i32, %arg2: i32) -> (i32, i32) {
    %c0_i32 = arith.constant 0 : i32
    return %arg0, %arg2 : i32, i32
  }
  func.func @transform_1(%arg0: i32, %arg1: i32, %arg2: i32) -> (i32, i32) {
    %c0_i32 = arith.constant 0 : i32
    return %arg2, %arg1 : i32, i32
  }
  func.func @transform_2(%arg0: i32, %arg1: i32, %arg2: i32) -> (i32, i32) {
    %c0_i32 = arith.constant 0 : i32
    return %arg2, %arg1 : i32, i32
  }
  func.func @transform_3(%arg0: i32, %arg1: i32, %arg2: i32) -> (i32, i32) {
    %c0_i32 = arith.constant 0 : i32
    return %arg2, %arg1 : i32, i32
  }
  func.func @transform_4(%arg0: i32, %arg1: i32, %arg2: i32) -> (i32, i32) {
    %c0_i32 = arith.constant 0 : i32
    %c0_i32_0 = arith.constant 0 : i32
    return %c0_i32, %arg1 : i32, i32
  }
  func.func @transform_5(%arg0: i32, %arg1: i32, %arg2: i32) -> (i32, i32) {
    %c0_i32 = arith.constant 0 : i32
    return %arg0, %arg1 : i32, i32
  }
}

</mosaic_0001>

<llo_original>
// kernel: tpu_custom_call.1
$region0: #{tpu_custom_call.1}
  #allocation0 [shape = 'u32[]', space=smem, size = 0x4, offset = 0x4, fixed_abs, tag = 'smem constant byte address 0x4 - core index']
  #allocation1 [shape = 'u32[72,128]{1,0:T(1,128)}', space=vmem, size = 0x9000, scoped, tag = 'internal scratch']
  %s0 = inlined_call_operand.hbm [shape: f32[256,256], index: 0, kind: input, shape index: {}]
  %s1 = inlined_call_operand.hbm [shape: bf16[256,128], index: 1, kind: input, shape index: {}]
  %s2 = inlined_call_operand.hbm [shape: bf16[256,128], index: 2, kind: input, shape index: {}]
  %s3 = inlined_call_operand.hbm [shape: s8[256,128], index: 3, kind: input, shape index: {}]
  %s4 = inlined_call_operand.vmem [shape: f32[1,128], index: 4, kind: input, shape index: {}]
  %s5 = inlined_call_operand.hbm [shape: f32[256,128], index: 5, kind: output, shape index: {}]
  %s6 = sld [smem:[#allocation0]]
  $region54: #{tpu_custom_call.1} parent=0
    _
  %s8 = ssub.s32 1, %s6
  %s9 = scalar_select 0, %s8, %s6
  $region1: #{tpu_custom_call.1} parent=0
    #allocation2 [shape = 'u8[262144]{0}', space=vmem, size = 0x40000, scoped, tag = 'input window, operand 0, single buffered']
    #allocation3 [shape = 's32[1]{0}', space=sflag, size = 0x4, scoped, tag = 'scoped memory for tpu_custom_call.1']
    #allocation4 [shape = 's32[1]{0}', space=sflag, size = 0x4, scoped, tag = 'scoped memory for tpu_custom_call.1']
    #allocation5 [shape = 'u8[65536]{0}', space=vmem, size = 0x10000, scoped, tag = 'input window, operand 1, single buffered']
    #allocation6 [shape = 's32[1]{0}', space=sflag, size = 0x4, scoped, tag = 'scoped memory for tpu_custom_call.1']
    #allocation7 [shape = 'u8[65536]{0}', space=vmem, size = 0x10000, scoped, tag = 'input window, operand 2, single buffered']
    #allocation8 [shape = 'u8[32768]{0}', space=vmem, size = 0x8000, scoped, tag = 'input window, operand 3, single buffered']
    #allocation9 [shape = 's32[1]{0}', space=sflag, size = 0x4, scoped, tag = 'scoped memory for tpu_custom_call.1']
    #allocation10 [shape = 'u8[131072]{0}', space=vmem, size = 0x20000, scoped, tag = 'output window, operand 0, single buffered']
    %10 = vsyncpa [#allocation3], 0
    %11 = vsyncpa [#allocation6], 0
    %12 = vsyncpa [#allocation9], 0
    %13 = vsyncpa [#allocation4], 0
    // Predicated region
    $region2: #{tpu_custom_call.1} parent=1 // pred_check
      _
    $region3: #{tpu_custom_call.1} parent=1 // pred_check_branch
      %15 = sbr.rel (0) target = $region5
    $region4: #{tpu_custom_call.1} parent=1 // pred_region
      %17 = vsyncadd [#allocation3], 0
      %s18 = sshll.u32 %s0, 4
      %s19 = int_to_ptr.hbm [resolvable:$true] %s18
      %s20 = sshll.u32 [#allocation2], 4
      %s21 = int_to_ptr.vmem [resolvable:$true] %s20
      %26 = dma.hbm_to_vmem [thread:$0]  %s19, 8192, %s21, [#allocation3], 256, 256, 16
    $region5: #{tpu_custom_call.1} parent=1 // pred_fallthru
      _
    // Predicated region
    $region6: #{tpu_custom_call.1} parent=1 // pred_check
      _
    $region7: #{tpu_custom_call.1} parent=1 // pred_check_branch
      %28 = sbr.rel (0) target = $region9
    $region8: #{tpu_custom_call.1} parent=1 // pred_region
      %30 = vsyncadd [#allocation6], 0
      %s31 = sshll.u32 %s1, 4
      %s32 = int_to_ptr.hbm [resolvable:$true] %s31
      %s33 = sshll.u32 [#allocation5], 4
      %s34 = int_to_ptr.vmem [resolvable:$true] %s33
      %39 = dma.hbm_to_vmem [thread:$0]  %s32, 2048, %s34, [#allocation6], 64, 64, 4
    $region9: #{tpu_custom_call.1} parent=1 // pred_fallthru
      _
    // Predicated region
    $region10: #{tpu_custom_call.1} parent=1 // pred_check
      _
    $region11: #{tpu_custom_call.1} parent=1 // pred_check_branch
      %41 = sbr.rel (0) target = $region13
    $region12: #{tpu_custom_call.1} parent=1 // pred_region
      %43 = vsyncadd [#allocation6], 0
      %s44 = sshll.u32 %s2, 4
      %s45 = int_to_ptr.hbm [resolvable:$true] %s44
      %s46 = sshll.u32 [#allocation7], 4
      %s47 = int_to_ptr.vmem [resolvable:$true] %s46
      %52 = dma.hbm_to_vmem [thread:$0]  %s45, 2048, %s47, [#allocation6], 64, 64, 4
    $region13: #{tpu_custom_call.1} parent=1 // pred_fallthru
      _
    // Predicated region
    $region14: #{tpu_custom_call.1} parent=1 // pred_check
      _
    $region15: #{tpu_custom_call.1} parent=1 // pred_check_branch
      %54 = sbr.rel (0) target = $region17
    $region16: #{tpu_custom_call.1} parent=1 // pred_region
      %56 = vsyncadd [#allocation9], 0
      %s57 = sshll.u32 %s3, 4
      %s58 = int_to_ptr.hbm [resolvable:$true] %s57
      %s59 = sshll.u32 [#allocation8], 4
      %s60 = int_to_ptr.vmem [resolvable:$true] %s59
      %65 = dma.hbm_to_vmem [thread:$0]  %s58, 1024, %s60, [#allocation9], 128, 128, 8
    $region17: #{tpu_custom_call.1} parent=1 // pred_fallthru
      _
    // Predicated region
    $region18: #{tpu_custom_call.1} parent=1 // pred_check
      _
    $region19: #{tpu_custom_call.1} parent=1 // pred_check_branch
      %67 = sbr.rel (0) target = $region21
    $region20: #{tpu_custom_call.1} parent=1 // pred_region
      _
    $region21: #{tpu_custom_call.1} parent=1 // pred_fallthru
      _
    // Predicated region
    $region22: #{tpu_custom_call.1} parent=1 // pred_check
      _
    $region23: #{tpu_custom_call.1} parent=1 // pred_check_branch
      %69 = sbr.rel (0) target = $region25
    $region24: #{tpu_custom_call.1} parent=1 // pred_region
      %71 = dma.done [#allocation3], 8192
    $region25: #{tpu_custom_call.1} parent=1 // pred_fallthru
      _
    // Predicated region
    $region26: #{tpu_custom_call.1} parent=1 // pred_check
      _
    $region27: #{tpu_custom_call.1} parent=1 // pred_check_branch
      %73 = sbr.rel (0) target = $region29
    $region28: #{tpu_custom_call.1} parent=1 // pred_region
      %75 = dma.done [#allocation6], 2048
    $region29: #{tpu_custom_call.1} parent=1 // pred_fallthru
      _
    // Predicated region
    $region30: #{tpu_custom_call.1} parent=1 // pred_check
      _
    $region31: #{tpu_custom_call.1} parent=1 // pred_check_branch
      %77 = sbr.rel (0) target = $region33
    $region32: #{tpu_custom_call.1} parent=1 // pred_region
      %79 = dma.done [#allocation6], 2048
    $region33: #{tpu_custom_call.1} parent=1 // pred_fallthru
      _
    // Predicated region
    $region34: #{tpu_custom_call.1} parent=1 // pred_check
      _
    $region35: #{tpu_custom_call.1} parent=1 // pred_check_branch
      %81 = sbr.rel (0) target = $region37
    $region36: #{tpu_custom_call.1} parent=1 // pred_region
      %83 = dma.done [#allocation9], 1024
    $region37: #{tpu_custom_call.1} parent=1 // pred_fallthru
      _
    %v87 = vld [vmem:[#allocation8] sm:$0xff]
    %v88 = vld [vmem:[#allocation8 + $0x8] sm:$0xff]
    %v89 = vld [vmem:[#allocation8 + $0x10] sm:$0xff]
    %v90 = vld [vmem:[#allocation8 + $0x18] sm:$0xff]
    %v91 = vld [vmem:[#allocation8 + $0x20] sm:$0xff]
    %v92 = vld [vmem:[#allocation8 + $0x28] sm:$0xff]
    %v93 = vld [vmem:[#allocation8 + $0x30] sm:$0xff]
    %v94 = vld [vmem:[#allocation8 + $0x38] sm:$0xff]
    %vm95 = vnez %v87
    %vm96 = vnez %v88
    %vm97 = vnez %v89
    %vm98 = vnez %v90
    %vm99 = vnez %v91
    %vm100 = vnez %v92
    %vm101 = vnez %v93
    %vm102 = vnez %v94
    %v103 = vld [vmem:[#allocation7] sm:$0xf]
    %v104 = vld [vmem:[#allocation7 + $0x4] sm:$0xf]
    %v105 = vld [vmem:[#allocation7 + $0x8] sm:$0xf]
    %v106 = vld [vmem:[#allocation7 + $0xc] sm:$0xf]
    %v107 = vld [vmem:[#allocation7 + $0x10] sm:$0xf]
    %v108 = vld [vmem:[#allocation7 + $0x14] sm:$0xf]
    %v109 = vld [vmem:[#allocation7 + $0x18] sm:$0xf]
    %v110 = vld [vmem:[#allocation7 + $0x1c] sm:$0xf]
    %v111 = vld [vmem:[#allocation7 + $0x20] sm:$0xf]
    %v112 = vld [vmem:[#allocation7 + $0x24] sm:$0xf]
    %v113 = vld [vmem:[#allocation7 + $0x28] sm:$0xf]
    %v114 = vld [vmem:[#allocation7 + $0x2c] sm:$0xf]
    %v115 = vld [vmem:[#allocation7 + $0x30] sm:$0xf]
    %v116 = vld [vmem:[#allocation7 + $0x34] sm:$0xf]
    %v117 = vld [vmem:[#allocation7 + $0x38] sm:$0xf]
    %v118 = vld [vmem:[#allocation7 + $0x3c] sm:$0xf]
    %v119 = vld [vmem:[#allocation7 + $0x40] sm:$0xf]
    %v120 = vld [vmem:[#allocation7 + $0x44] sm:$0xf]
    %v121 = vld [vmem:[#allocation7 + $0x48] sm:$0xf]
    %v122 = vld [vmem:[#allocation7 + $0x4c] sm:$0xf]
    %v123 = vld [vmem:[#allocation7 + $0x50] sm:$0xf]
    %v124 = vld [vmem:[#allocation7 + $0x54] sm:$0xf]
    %v125 = vld [vmem:[#allocation7 + $0x58] sm:$0xf]
    %v126 = vld [vmem:[#allocation7 + $0x5c] sm:$0xf]
    %v127 = vld [vmem:[#allocation7 + $0x60] sm:$0xf]
    %v128 = vld [vmem:[#allocation7 + $0x64] sm:$0xf]
    %v129 = vld [vmem:[#allocation7 + $0x68] sm:$0xf]
    %v130 = vld [vmem:[#allocation7 + $0x6c] sm:$0xf]
    %v131 = vld [vmem:[#allocation7 + $0x70] sm:$0xf]
    %v132 = vld [vmem:[#allocation7 + $0x74] sm:$0xf]
    %v133 = vld [vmem:[#allocation7 + $0x78] sm:$0xf]
    %v134 = vld [vmem:[#allocation7 + $0x7c] sm:$0xf]
    %v135 = vunpack.c.l.bf16 %v103
    %v136 = vunpack.c.l.bf16 %v104
    %v137 = vunpack.c.l.bf16 %v105
    %v138 = vunpack.c.l.bf16 %v106
    %v139 = vunpack.c.l.bf16 %v107
    %v140 = vunpack.c.l.bf16 %v108
    %v141 = vunpack.c.l.bf16 %v109
    %v142 = vunpack.c.l.bf16 %v110
    %v143 = vunpack.c.l.bf16 %v111
    %v144 = vunpack.c.l.bf16 %v112
    %v145 = vunpack.c.l.bf16 %v113
    %v146 = vunpack.c.l.bf16 %v114
    %v147 = vunpack.c.l.bf16 %v115
    %v148 = vunpack.c.l.bf16 %v116
    %v149 = vunpack.c.l.bf16 %v117
    %v150 = vunpack.c.l.bf16 %v118
    %v151 = vunpack.c.l.bf16 %v119
    %v152 = vunpack.c.l.bf16 %v120
    %v153 = vunpack.c.l.bf16 %v121
    %v154 = vunpack.c.l.bf16 %v122
    %v155 = vunpack.c.l.bf16 %v123
    %v156 = vunpack.c.l.bf16 %v124
    %v157 = vunpack.c.l.bf16 %v125
    %v158 = vunpack.c.l.bf16 %v126
    %v159 = vunpack.c.l.bf16 %v127
    %v160 = vunpack.c.l.bf16 %v128
    %v161 = vunpack.c.l.bf16 %v129
    %v162 = vunpack.c.l.bf16 %v130
    %v163 = vunpack.c.l.bf16 %v131
    %v164 = vunpack.c.l.bf16 %v132
    %v165 = vunpack.c.l.bf16 %v133
    %v166 = vunpack.c.l.bf16 %v134
    %v167 = vmul.f32 %v135, 2.0
    %v168 = vmul.f32 %v136, 2.0
    %v169 = vmul.f32 %v137, 2.0
    %v170 = vmul.f32 %v138, 2.0
    %v171 = vmul.f32 %v139, 2.0
    %v172 = vmul.f32 %v140, 2.0
    %v173 = vmul.f32 %v141, 2.0
    %v174 = vmul.f32 %v142, 2.0
    %v175 = vmul.f32 %v143, 2.0
    %v176 = vmul.f32 %v144, 2.0
    %v177 = vmul.f32 %v145, 2.0
    %v178 = vmul.f32 %v146, 2.0
    %v179 = vmul.f32 %v147, 2.0
    %v180 = vmul.f32 %v148, 2.0
    %v181 = vmul.f32 %v149, 2.0
    %v182 = vmul.f32 %v150, 2.0
    %v183 = vmul.f32 %v151, 2.0
    %v184 = vmul.f32 %v152, 2.0
    %v185 = vmul.f32 %v153, 2.0
    %v186 = vmul.f32 %v154, 2.0
    %v187 = vmul.f32 %v155, 2.0
    %v188 = vmul.f32 %v156, 2.0
    %v189 = vmul.f32 %v157, 2.0
    %v190 = vmul.f32 %v158, 2.0
    %v191 = vmul.f32 %v159, 2.0
    %v192 = vmul.f32 %v160, 2.0
    %v193 = vmul.f32 %v161, 2.0
    %v194 = vmul.f32 %v162, 2.0
    %v195 = vmul.f32 %v163, 2.0
    %v196 = vmul.f32 %v164, 2.0
    %v197 = vmul.f32 %v165, 2.0
    %v198 = vmul.f32 %v166, 2.0
    %v199 = vpack.c.bf16 %v167, %v167
    %v200 = vpack.c.bf16 %v168, %v168
    %v201 = vpack.c.bf16 %v169, %v169
    %v202 = vpack.c.bf16 %v170, %v170
    %v203 = vpack.c.bf16 %v171, %v171
    %v204 = vpack.c.bf16 %v172, %v172
    %v205 = vpack.c.bf16 %v173, %v173
    %v206 = vpack.c.bf16 %v174, %v174
    %v207 = vpack.c.bf16 %v175, %v175
    %v208 = vpack.c.bf16 %v176, %v176
    %v209 = vpack.c.bf16 %v177, %v177
    %v210 = vpack.c.bf16 %v178, %v178
    %v211 = vpack.c.bf16 %v179, %v179
    %v212 = vpack.c.bf16 %v180, %v180
    %v213 = vpack.c.bf16 %v181, %v181
    %v214 = vpack.c.bf16 %v182, %v182
    %v215 = vpack.c.bf16 %v183, %v183
    %v216 = vpack.c.bf16 %v184, %v184
    %v217 = vpack.c.bf16 %v185, %v185
    %v218 = vpack.c.bf16 %v186, %v186
    %v219 = vpack.c.bf16 %v187, %v187
    %v220 = vpack.c.bf16 %v188, %v188
    %v221 = vpack.c.bf16 %v189, %v189
    %v222 = vpack.c.bf16 %v190, %v190
    %v223 = vpack.c.bf16 %v191, %v191
    %v224 = vpack.c.bf16 %v192, %v192
    %v225 = vpack.c.bf16 %v193, %v193
    %v226 = vpack.c.bf16 %v194, %v194
    %v227 = vpack.c.bf16 %v195, %v195
    %v228 = vpack.c.bf16 %v196, %v196
    %v229 = vpack.c.bf16 %v197, %v197
    %v230 = vpack.c.bf16 %v198, %v198
    %v231 = vld [vmem:[#allocation5] sm:$0xf]
    %v232 = vld [vmem:[#allocation5 + $0x4] sm:$0xf]
    %v233 = vld [vmem:[#allocation5 + $0x8] sm:$0xf]
    %v234 = vld [vmem:[#allocation5 + $0xc] sm:$0xf]
    %v235 = vld [vmem:[#allocation5 + $0x10] sm:$0xf]
    %v236 = vld [vmem:[#allocation5 + $0x14] sm:$0xf]
    %v237 = vld [vmem:[#allocation5 + $0x18] sm:$0xf]
    %v238 = vld [vmem:[#allocation5 + $0x1c] sm:$0xf]
    %v239 = vld [vmem:[#allocation5 + $0x20] sm:$0xf]
    %v240 = vld [vmem:[#allocation5 + $0x24] sm:$0xf]
    %v241 = vld [vmem:[#allocation5 + $0x28] sm:$0xf]
    %v242 = vld [vmem:[#allocation5 + $0x2c] sm:$0xf]
    %v243 = vld [vmem:[#allocation5 + $0x30] sm:$0xf]
    %v244 = vld [vmem:[#allocation5 + $0x34] sm:$0xf]
    %v245 = vld [vmem:[#allocation5 + $0x38] sm:$0xf]
    %v246 = vld [vmem:[#allocation5 + $0x3c] sm:$0xf]
    %v247 = vld [vmem:[#allocation5 + $0x40] sm:$0xf]
    %v248 = vld [vmem:[#allocation5 + $0x44] sm:$0xf]
    %v249 = vld [vmem:[#allocation5 + $0x48] sm:$0xf]
    %v250 = vld [vmem:[#allocation5 + $0x4c] sm:$0xf]
    %v251 = vld [vmem:[#allocation5 + $0x50] sm:$0xf]
    %v252 = vld [vmem:[#allocation5 + $0x54] sm:$0xf]
    %v253 = vld [vmem:[#allocation5 + $0x58] sm:$0xf]
    %v254 = vld [vmem:[#allocation5 + $0x5c] sm:$0xf]
    %v255 = vld [vmem:[#allocation5 + $0x60] sm:$0xf]
    %v256 = vld [vmem:[#allocation5 + $0x64] sm:$0xf]
    %v257 = vld [vmem:[#allocation5 + $0x68] sm:$0xf]
    %v258 = vld [vmem:[#allocation5 + $0x6c] sm:$0xf]
    %v259 = vld [vmem:[#allocation5 + $0x70] sm:$0xf]
    %v260 = vld [vmem:[#allocation5 + $0x74] sm:$0xf]
    %v261 = vld [vmem:[#allocation5 + $0x78] sm:$0xf]
    %v262 = vld [vmem:[#allocation5 + $0x7c] sm:$0xf]
    %v263 = vsel %vm95, 16843009, 0
    %v264 = vsel %vm96, 16843009, 0
    %v265 = vsel %vm97, 16843009, 0
    %v266 = vsel %vm98, 16843009, 0
    %v267 = vsel %vm99, 16843009, 0
    %v268 = vsel %vm100, 16843009, 0
    %v269 = vsel %vm101, 16843009, 0
    %v270 = vsel %vm102, 16843009, 0
    %v271 = vunpack.c.0.s8 %v263
    %v272 = vunpack.c.1.s8 %v263
    %v273 = vunpack.c.2.s8 %v263
    %v274 = vunpack.c.3.s8 %v263
    %v275 = vunpack.c.0.s8 %v264
    %v276 = vunpack.c.1.s8 %v264
    %v277 = vunpack.c.2.s8 %v264
    %v278 = vunpack.c.3.s8 %v264
    %v279 = vunpack.c.0.s8 %v265
    %v280 = vunpack.c.1.s8 %v265
    %v281 = vunpack.c.2.s8 %v265
    %v282 = vunpack.c.3.s8 %v265
    %v283 = vunpack.c.0.s8 %v266
    %v284 = vunpack.c.1.s8 %v266
    %v285 = vunpack.c.2.s8 %v266
    %v286 = vunpack.c.3.s8 %v266
    %v287 = vunpack.c.0.s8 %v267
    %v288 = vunpack.c.1.s8 %v267
    %v289 = vunpack.c.2.s8 %v267
    %v290 = vunpack.c.3.s8 %v267
    %v291 = vunpack.c.0.s8 %v268
    %v292 = vunpack.c.1.s8 %v268
    %v293 = vunpack.c.2.s8 %v268
    %v294 = vunpack.c.3.s8 %v268
    %v295 = vunpack.c.0.s8 %v269
    %v296 = vunpack.c.1.s8 %v269
    %v297 = vunpack.c.2.s8 %v269
    %v298 = vunpack.c.3.s8 %v269
    %v299 = vunpack.c.0.s8 %v270
    %v300 = vunpack.c.1.s8 %v270
    %v301 = vunpack.c.2.s8 %v270
    %v302 = vunpack.c.3.s8 %v270
    %v303 = vpack.c.b16 %v271, %v271
    %v304 = vpack.c.b8 %v303, %v303
    %v305 = vpack.c.b16 %v272, %v272
    %v306 = vpack.c.b8 %v305, %v305
    %v307 = vpack.c.b16 %v273, %v273
    %v308 = vpack.c.b8 %v307, %v307
    %v309 = vpack.c.b16 %v274, %v274
    %v310 = vpack.c.b8 %v309, %v309
    %v311 = vpack.c.b16 %v275, %v275
    %v312 = vpack.c.b8 %v311, %v311
    %v313 = vpack.c.b16 %v276, %v276
    %v314 = vpack.c.b8 %v313, %v313
    %v315 = vpack.c.b16 %v277, %v277
    %v316 = vpack.c.b8 %v315, %v315
    %v317 = vpack.c.b16 %v278, %v278
    %v318 = vpack.c.b8 %v317, %v317
    %v319 = vpack.c.b16 %v279, %v279
    %v320 = vpack.c.b8 %v319, %v319
    %v321 = vpack.c.b16 %v280, %v280
    %v322 = vpack.c.b8 %v321, %v321
    %v323 = vpack.c.b16 %v281, %v281
    %v324 = vpack.c.b8 %v323, %v323
    %v325 = vpack.c.b16 %v282, %v282
    %v326 = vpack.c.b8 %v325, %v325
    %v327 = vpack.c.b16 %v283, %v283
    %v328 = vpack.c.b8 %v327, %v327
    %v329 = vpack.c.b16 %v284, %v284
    %v330 = vpack.c.b8 %v329, %v329
    %v331 = vpack.c.b16 %v285, %v285
    %v332 = vpack.c.b8 %v331, %v331
    %v333 = vpack.c.b16 %v286, %v286
    %v334 = vpack.c.b8 %v333, %v333
    %v335 = vpack.c.b16 %v287, %v287
    %v336 = vpack.c.b8 %v335, %v335
    %v337 = vpack.c.b16 %v288, %v288
    %v338 = vpack.c.b8 %v337, %v337
    %v339 = vpack.c.b16 %v289, %v289
    %v340 = vpack.c.b8 %v339, %v339
    %v341 = vpack.c.b16 %v290, %v290
    %v342 = vpack.c.b8 %v341, %v341
    %v343 = vpack.c.b16 %v291, %v291
    %v344 = vpack.c.b8 %v343, %v343
    %v345 = vpack.c.b16 %v292, %v292
    %v346 = vpack.c.b8 %v345, %v345
    %v347 = vpack.c.b16 %v293, %v293
    %v348 = vpack.c.b8 %v347, %v347
    %v349 = vpack.c.b16 %v294, %v294
    %v350 = vpack.c.b8 %v349, %v349
    %v351 = vpack.c.b16 %v295, %v295
    %v352 = vpack.c.b8 %v351, %v351
    %v353 = vpack.c.b16 %v296, %v296
    %v354 = vpack.c.b8 %v353, %v353
    %v355 = vpack.c.b16 %v297, %v297
    %v356 = vpack.c.b8 %v355, %v355
    %v357 = vpack.c.b16 %v298, %v298
    %v358 = vpack.c.b8 %v357, %v357
    %v359 = vpack.c.b16 %v299, %v299
    %v360 = vpack.c.b8 %v359, %v359
    %v361 = vpack.c.b16 %v300, %v300
    %v362 = vpack.c.b8 %v361, %v361
    %v363 = vpack.c.b16 %v301, %v301
    %v364 = vpack.c.b8 %v363, %v363
    %v365 = vpack.c.b16 %v302, %v302
    %v366 = vpack.c.b8 %v365, %v365
    %vm367 = vnez %v304
    %vm368 = vnez %v306
    %vm369 = vnez %v308
    %vm370 = vnez %v310
    %vm371 = vnez %v312
    %vm372 = vnez %v314
    %vm373 = vnez %v316
    %vm374 = vnez %v318
    %vm375 = vnez %v320
    %vm376 = vnez %v322
    %vm377 = vnez %v324
    %vm378 = vnez %v326
    %vm379 = vnez %v328
    %vm380 = vnez %v330
    %vm381 = vnez %v332
    %vm382 = vnez %v334
    %vm383 = vnez %v336
    %vm384 = vnez %v338
    %vm385 = vnez %v340
    %vm386 = vnez %v342
    %vm387 = vnez %v344
    %vm388 = vnez %v346
    %vm389 = vnez %v348
    %vm390 = vnez %v350
    %vm391 = vnez %v352
    %vm392 = vnez %v354
    %vm393 = vnez %v356
    %vm394 = vnez %v358
    %vm395 = vnez %v360
    %vm396 = vnez %v362
    %vm397 = vnez %v364
    %vm398 = vnez %v366
    %v399 = vsel %vm367, 16843009, 0
    %v400 = vsel %vm368, 16843009, 0
    %v401 = vsel %vm369, 16843009, 0
    %v402 = vsel %vm370, 16843009, 0
    %v403 = vsel %vm371, 16843009, 0
    %v404 = vsel %vm372, 16843009, 0
    %v405 = vsel %vm373, 16843009, 0
    %v406 = vsel %vm374, 16843009, 0
    %v407 = vsel %vm375, 16843009, 0
    %v408 = vsel %vm376, 16843009, 0
    %v409 = vsel %vm377, 16843009, 0
    %v410 = vsel %vm378, 16843009, 0
    %v411 = vsel %vm379, 16843009, 0
    %v412 = vsel %vm380, 16843009, 0
    %v413 = vsel %vm381, 16843009, 0
    %v414 = vsel %vm382, 16843009, 0
    %v415 = vsel %vm383, 16843009, 0
    %v416 = vsel %vm384, 16843009, 0
    %v417 = vsel %vm385, 16843009, 0
    %v418 = vsel %vm386, 16843009, 0
    %v419 = vsel %vm387, 16843009, 0
    %v420 = vsel %vm388, 16843009, 0
    %v421 = vsel %vm389, 16843009, 0
    %v422 = vsel %vm390, 16843009, 0
    %v423 = vsel %vm391, 16843009, 0
    %v424 = vsel %vm392, 16843009, 0
    %v425 = vsel %vm393, 16843009, 0
    %v426 = vsel %vm394, 16843009, 0
    %v427 = vsel %vm395, 16843009, 0
    %v428 = vsel %vm396, 16843009, 0
    %v429 = vsel %vm397, 16843009, 0
    %v430 = vsel %vm398, 16843009, 0
    %v431 = vunpack.c.1.s8 %v399
    %v432 = vunpack.c.0.s8 %v399
    %v433 = vpack.c.b16 %v431, %v432
    %v434 = vunpack.c.1.s8 %v400
    %v435 = vunpack.c.0.s8 %v400
    %v436 = vpack.c.b16 %v434, %v435
    %v437 = vunpack.c.1.s8 %v401
    %v438 = vunpack.c.0.s8 %v401
    %v439 = vpack.c.b16 %v437, %v438
    %v440 = vunpack.c.1.s8 %v402
    %v441 = vunpack.c.0.s8 %v402
    %v442 = vpack.c.b16 %v440, %v441
    %v443 = vunpack.c.1.s8 %v403
    %v444 = vunpack.c.0.s8 %v403
    %v445 = vpack.c.b16 %v443, %v444
    %v446 = vunpack.c.1.s8 %v404
    %v447 = vunpack.c.0.s8 %v404
    %v448 = vpack.c.b16 %v446, %v447
    %v449 = vunpack.c.1.s8 %v405
    %v450 = vunpack.c.0.s8 %v405
    %v451 = vpack.c.b16 %v449, %v450
    %v452 = vunpack.c.1.s8 %v406
    %v453 = vunpack.c.0.s8 %v406
    %v454 = vpack.c.b16 %v452, %v453
    %v455 = vunpack.c.1.s8 %v407
    %v456 = vunpack.c.0.s8 %v407
    %v457 = vpack.c.b16 %v455, %v456
    %v458 = vunpack.c.1.s8 %v408
    %v459 = vunpack.c.0.s8 %v408
    %v460 = vpack.c.b16 %v458, %v459
    %v461 = vunpack.c.1.s8 %v409
    %v462 = vunpack.c.0.s8 %v409
    %v463 = vpack.c.b16 %v461, %v462
    %v464 = vunpack.c.1.s8 %v410
    %v465 = vunpack.c.0.s8 %v410
    %v466 = vpack.c.b16 %v464, %v465
    %v467 = vunpack.c.1.s8 %v411
    %v468 = vunpack.c.0.s8 %v411
    %v469 = vpack.c.b16 %v467, %v468
    %v470 = vunpack.c.1.s8 %v412
    %v471 = vunpack.c.0.s8 %v412
    %v472 = vpack.c.b16 %v470, %v471
    %v473 = vunpack.c.1.s8 %v413
    %v474 = vunpack.c.0.s8 %v413
    %v475 = vpack.c.b16 %v473, %v474
    %v476 = vunpack.c.1.s8 %v414
    %v477 = vunpack.c.0.s8 %v414
    %v478 = vpack.c.b16 %v476, %v477
    %v479 = vunpack.c.1.s8 %v415
    %v480 = vunpack.c.0.s8 %v415
    %v481 = vpack.c.b16 %v479, %v480
    %v482 = vunpack.c.1.s8 %v416
    %v483 = vunpack.c.0.s8 %v416
    %v484 = vpack.c.b16 %v482, %v483
    %v485 = vunpack.c.1.s8 %v417
    %v486 = vunpack.c.0.s8 %v417
    %v487 = vpack.c.b16 %v485, %v486
    %v488 = vunpack.c.1.s8 %v418
    %v489 = vunpack.c.0.s8 %v418
    %v490 = vpack.c.b16 %v488, %v489
    %v491 = vunpack.c.1.s8 %v419
    %v492 = vunpack.c.0.s8 %v419
    %v493 = vpack.c.b16 %v491, %v492
    %v494 = vunpack.c.1.s8 %v420
    %v495 = vunpack.c.0.s8 %v420
    %v496 = vpack.c.b16 %v494, %v495
    %v497 = vunpack.c.1.s8 %v421
    %v498 = vunpack.c.0.s8 %v421
    %v499 = vpack.c.b16 %v497, %v498
    %v500 = vunpack.c.1.s8 %v422
    %v501 = vunpack.c.0.s8 %v422
    %v502 = vpack.c.b16 %v500, %v501
    %v503 = vunpack.c.1.s8 %v423
    %v504 = vunpack.c.0.s8 %v423
    %v505 = vpack.c.b16 %v503, %v504
    %v506 = vunpack.c.1.s8 %v424
    %v507 = vunpack.c.0.s8 %v424
    %v508 = vpack.c.b16 %v506, %v507
    %v509 = vunpack.c.1.s8 %v425
    %v510 = vunpack.c.0.s8 %v425
    %v511 = vpack.c.b16 %v509, %v510
    %v512 = vunpack.c.1.s8 %v426
    %v513 = vunpack.c.0.s8 %v426
    %v514 = vpack.c.b16 %v512, %v513
    %v515 = vunpack.c.1.s8 %v427
    %v516 = vunpack.c.0.s8 %v427
    %v517 = vpack.c.b16 %v515, %v516
    %v518 = vunpack.c.1.s8 %v428
    %v519 = vunpack.c.0.s8 %v428
    %v520 = vpack.c.b16 %v518, %v519
    %v521 = vunpack.c.1.s8 %v429
    %v522 = vunpack.c.0.s8 %v429
    %v523 = vpack.c.b16 %v521, %v522
    %v524 = vunpack.c.1.s8 %v430
    %v525 = vunpack.c.0.s8 %v430
    %v526 = vpack.c.b16 %v524, %v525
    %v527 = vunpack.c.l.b16 %v433
    %v528 = vunpack.c.h.b16 %v433
    %v529 = vunpack.c.l.b16 0
    %v530 = vunpack.c.h.b16 0
    %vm531 = vcmp.ne.s32.totalorder %v527, %v529
    %vm532 = vcmp.ne.s32.totalorder %v528, %v530
    %vm533 = vmpackc.low %vm532, %vm531
    %v534 = vunpack.c.l.b16 %v436
    %v535 = vunpack.c.h.b16 %v436
    %v536 = vunpack.c.l.b16 0
    %v537 = vunpack.c.h.b16 0
    %vm538 = vcmp.ne.s32.totalorder %v534, %v536
    %vm539 = vcmp.ne.s32.totalorder %v535, %v537
    %vm540 = vmpackc.low %vm539, %vm538
    %v541 = vunpack.c.l.b16 %v439
    %v542 = vunpack.c.h.b16 %v439
    %v543 = vunpack.c.l.b16 0
    %v544 = vunpack.c.h.b16 0
    %vm545 = vcmp.ne.s32.totalorder %v541, %v543
    %vm546 = vcmp.ne.s32.totalorder %v542, %v544
    %vm547 = vmpackc.low %vm546, %vm545
    %v548 = vunpack.c.l.b16 %v442
    %v549 = vunpack.c.h.b16 %v442
    %v550 = vunpack.c.l.b16 0
    %v551 = vunpack.c.h.b16 0
    %vm552 = vcmp.ne.s32.totalorder %v548, %v550
    %vm553 = vcmp.ne.s32.totalorder %v549, %v551
    %vm554 = vmpackc.low %vm553, %vm552
    %v555 = vunpack.c.l.b16 %v445
    %v556 = vunpack.c.h.b16 %v445
    %v557 = vunpack.c.l.b16 0
    %v558 = vunpack.c.h.b16 0
    %vm559 = vcmp.ne.s32.totalorder %v555, %v557
    %vm560 = vcmp.ne.s32.totalorder %v556, %v558
    %vm561 = vmpackc.low %vm560, %vm559
    %v562 = vunpack.c.l.b16 %v448
    %v563 = vunpack.c.h.b16 %v448
    %v564 = vunpack.c.l.b16 0
    %v565 = vunpack.c.h.b16 0
    %vm566 = vcmp.ne.s32.totalorder %v562, %v564
    %vm567 = vcmp.ne.s32.totalorder %v563, %v565
    %vm568 = vmpackc.low %vm567, %vm566
    %v569 = vunpack.c.l.b16 %v451
    %v570 = vunpack.c.h.b16 %v451
    %v571 = vunpack.c.l.b16 0
    %v572 = vunpack.c.h.b16 0
    %vm573 = vcmp.ne.s32.totalorder %v569, %v571
    %vm574 = vcmp.ne.s32.totalorder %v570, %v572
    %vm575 = vmpackc.low %vm574, %vm573
    %v576 = vunpack.c.l.b16 %v454
    %v577 = vunpack.c.h.b16 %v454
    %v578 = vunpack.c.l.b16 0
    %v579 = vunpack.c.h.b16 0
    %vm580 = vcmp.ne.s32.totalorder %v576, %v578
    %vm581 = vcmp.ne.s32.totalorder %v577, %v579
    %vm582 = vmpackc.low %vm581, %vm580
    %v583 = vunpack.c.l.b16 %v457
    %v584 = vunpack.c.h.b16 %v457
    %v585 = vunpack.c.l.b16 0
    %v586 = vunpack.c.h.b16 0
    %vm587 = vcmp.ne.s32.totalorder %v583, %v585
    %vm588 = vcmp.ne.s32.totalorder %v584, %v586
    %vm589 = vmpackc.low %vm588, %vm587
    %v590 = vunpack.c.l.b16 %v460
    %v591 = vunpack.c.h.b16 %v460
    %v592 = vunpack.c.l.b16 0
    %v593 = vunpack.c.h.b16 0
    %vm594 = vcmp.ne.s32.totalorder %v590, %v592
    %vm595 = vcmp.ne.s32.totalorder %v591, %v593
    %vm596 = vmpackc.low %vm595, %vm594
    %v597 = vunpack.c.l.b16 %v463
    %v598 = vunpack.c.h.b16 %v463
    %v599 = vunpack.c.l.b16 0
    %v600 = vunpack.c.h.b16 0
    %vm601 = vcmp.ne.s32.totalorder %v597, %v599
    %vm602 = vcmp.ne.s32.totalorder %v598, %v600
    %vm603 = vmpackc.low %vm602, %vm601
    %v604 = vunpack.c.l.b16 %v466
    %v605 = vunpack.c.h.b16 %v466
    %v606 = vunpack.c.l.b16 0
    %v607 = vunpack.c.h.b16 0
    %vm608 = vcmp.ne.s32.totalorder %v604, %v606
    %vm609 = vcmp.ne.s32.totalorder %v605, %v607
    %vm610 = vmpackc.low %vm609, %vm608
    %v611 = vunpack.c.l.b16 %v469
    %v612 = vunpack.c.h.b16 %v469
    %v613 = vunpack.c.l.b16 0
    %v614 = vunpack.c.h.b16 0
    %vm615 = vcmp.ne.s32.totalorder %v611, %v613
    %vm616 = vcmp.ne.s32.totalorder %v612, %v614
    %vm617 = vmpackc.low %vm616, %vm615
    %v618 = vunpack.c.l.b16 %v472
    %v619 = vunpack.c.h.b16 %v472
    %v620 = vunpack.c.l.b16 0
    %v621 = vunpack.c.h.b16 0
    %vm622 = vcmp.ne.s32.totalorder %v618, %v620
    %vm623 = vcmp.ne.s32.totalorder %v619, %v621
    %vm624 = vmpackc.low %vm623, %vm622
    %v625 = vunpack.c.l.b16 %v475
    %v626 = vunpack.c.h.b16 %v475
    %v627 = vunpack.c.l.b16 0
    %v628 = vunpack.c.h.b16 0
    %vm629 = vcmp.ne.s32.totalorder %v625, %v627
    %vm630 = vcmp.ne.s32.totalorder %v626, %v628
    %vm631 = vmpackc.low %vm630, %vm629
    %v632 = vunpack.c.l.b16 %v478
    %v633 = vunpack.c.h.b16 %v478
    %v634 = vunpack.c.l.b16 0
    %v635 = vunpack.c.h.b16 0
    %vm636 = vcmp.ne.s32.totalorder %v632, %v634
    %vm637 = vcmp.ne.s32.totalorder %v633, %v635
    %vm638 = vmpackc.low %vm637, %vm636
    %v639 = vunpack.c.l.b16 %v481
    %v640 = vunpack.c.h.b16 %v481
    %v641 = vunpack.c.l.b16 0
    %v642 = vunpack.c.h.b16 0
    %vm643 = vcmp.ne.s32.totalorder %v639, %v641
    %vm644 = vcmp.ne.s32.totalorder %v640, %v642
    %vm645 = vmpackc.low %vm644, %vm643
    %v646 = vunpack.c.l.b16 %v484
    %v647 = vunpack.c.h.b16 %v484
    %v648 = vunpack.c.l.b16 0
    %v649 = vunpack.c.h.b16 0
    %vm650 = vcmp.ne.s32.totalorder %v646, %v648
    %vm651 = vcmp.ne.s32.totalorder %v647, %v649
    %vm652 = vmpackc.low %vm651, %vm650
    %v653 = vunpack.c.l.b16 %v487
    %v654 = vunpack.c.h.b16 %v487
    %v655 = vunpack.c.l.b16 0
    %v656 = vunpack.c.h.b16 0
    %vm657 = vcmp.ne.s32.totalorder %v653, %v655
    %vm658 = vcmp.ne.s32.totalorder %v654, %v656
    %vm659 = vmpackc.low %vm658, %vm657
    %v660 = vunpack.c.l.b16 %v490
    %v661 = vunpack.c.h.b16 %v490
    %v662 = vunpack.c.l.b16 0
    %v663 = vunpack.c.h.b16 0
    %vm664 = vcmp.ne.s32.totalorder %v660, %v662
    %vm665 = vcmp.ne.s32.totalorder %v661, %v663
    %vm666 = vmpackc.low %vm665, %vm664
    %v667 = vunpack.c.l.b16 %v493
    %v668 = vunpack.c.h.b16 %v493
    %v669 = vunpack.c.l.b16 0
    %v670 = vunpack.c.h.b16 0
    %vm671 = vcmp.ne.s32.totalorder %v667, %v669
    %vm672 = vcmp.ne.s32.totalorder %v668, %v670
    %vm673 = vmpackc.low %vm672, %vm671
    %v674 = vunpack.c.l.b16 %v496
    %v675 = vunpack.c.h.b16 %v496
    %v676 = vunpack.c.l.b16 0
    %v677 = vunpack.c.h.b16 0
    %vm678 = vcmp.ne.s32.totalorder %v674, %v676
    %vm679 = vcmp.ne.s32.totalorder %v675, %v677
    %vm680 = vmpackc.low %vm679, %vm678
    %v681 = vunpack.c.l.b16 %v499
    %v682 = vunpack.c.h.b16 %v499
    %v683 = vunpack.c.l.b16 0
    %v684 = vunpack.c.h.b16 0
    %vm685 = vcmp.ne.s32.totalorder %v681, %v683
    %vm686 = vcmp.ne.s32.totalorder %v682, %v684
    %vm687 = vmpackc.low %vm686, %vm685
    %v688 = vunpack.c.l.b16 %v502
    %v689 = vunpack.c.h.b16 %v502
    %v690 = vunpack.c.l.b16 0
    %v691 = vunpack.c.h.b16 0
    %vm692 = vcmp.ne.s32.totalorder %v688, %v690
    %vm693 = vcmp.ne.s32.totalorder %v689, %v691
    %vm694 = vmpackc.low %vm693, %vm692
    %v695 = vunpack.c.l.b16 %v505
    %v696 = vunpack.c.h.b16 %v505
    %v697 = vunpack.c.l.b16 0
    %v698 = vunpack.c.h.b16 0
    %vm699 = vcmp.ne.s32.totalorder %v695, %v697
    %vm700 = vcmp.ne.s32.totalorder %v696, %v698
    %vm701 = vmpackc.low %vm700, %vm699
    %v702 = vunpack.c.l.b16 %v508
    %v703 = vunpack.c.h.b16 %v508
    %v704 = vunpack.c.l.b16 0
    %v705 = vunpack.c.h.b16 0
    %vm706 = vcmp.ne.s32.totalorder %v702, %v704
    %vm707 = vcmp.ne.s32.totalorder %v703, %v705
    %vm708 = vmpackc.low %vm707, %vm706
    %v709 = vunpack.c.l.b16 %v511
    %v710 = vunpack.c.h.b16 %v511
    %v711 = vunpack.c.l.b16 0
    %v712 = vunpack.c.h.b16 0
    %vm713 = vcmp.ne.s32.totalorder %v709, %v711
    %vm714 = vcmp.ne.s32.totalorder %v710, %v712
    %vm715 = vmpackc.low %vm714, %vm713
    %v716 = vunpack.c.l.b16 %v514
    %v717 = vunpack.c.h.b16 %v514
    %v718 = vunpack.c.l.b16 0
    %v719 = vunpack.c.h.b16 0
    %vm720 = vcmp.ne.s32.totalorder %v716, %v718
    %vm721 = vcmp.ne.s32.totalorder %v717, %v719
    %vm722 = vmpackc.low %vm721, %vm720
    %v723 = vunpack.c.l.b16 %v517
    %v724 = vunpack.c.h.b16 %v517
    %v725 = vunpack.c.l.b16 0
    %v726 = vunpack.c.h.b16 0
    %vm727 = vcmp.ne.s32.totalorder %v723, %v725
    %vm728 = vcmp.ne.s32.totalorder %v724, %v726
    %vm729 = vmpackc.low %vm728, %vm727
    %v730 = vunpack.c.l.b16 %v520
    %v731 = vunpack.c.h.b16 %v520
    %v732 = vunpack.c.l.b16 0
    %v733 = vunpack.c.h.b16 0
    %vm734 = vcmp.ne.s32.totalorder %v730, %v732
    %vm735 = vcmp.ne.s32.totalorder %v731, %v733
    %vm736 = vmpackc.low %vm735, %vm734
    %v737 = vunpack.c.l.b16 %v523
    %v738 = vunpack.c.h.b16 %v523
    %v739 = vunpack.c.l.b16 0
    %v740 = vunpack.c.h.b16 0
    %vm741 = vcmp.ne.s32.totalorder %v737, %v739
    %vm742 = vcmp.ne.s32.totalorder %v738, %v740
    %vm743 = vmpackc.low %vm742, %vm741
    %v744 = vunpack.c.l.b16 %v526
    %v745 = vunpack.c.h.b16 %v526
    %v746 = vunpack.c.l.b16 0
    %v747 = vunpack.c.h.b16 0
    %vm748 = vcmp.ne.s32.totalorder %v744, %v746
    %vm749 = vcmp.ne.s32.totalorder %v745, %v747
    %vm750 = vmpackc.low %vm749, %vm748
    %v751 = vsel %vm533, %v199, %v231
    %v752 = vsel %vm540, %v200, %v232
    %v753 = vsel %vm547, %v201, %v233
    %v754 = vsel %vm554, %v202, %v234
    %v755 = vsel %vm561, %v203, %v235
    %v756 = vsel %vm568, %v204, %v236
    %v757 = vsel %vm575, %v205, %v237
    %v758 = vsel %vm582, %v206, %v238
    %v759 = vsel %vm589, %v207, %v239
    %v760 = vsel %vm596, %v208, %v240
    %v761 = vsel %vm603, %v209, %v241
    %v762 = vsel %vm610, %v210, %v242
    %v763 = vsel %vm617, %v211, %v243
    %v764 = vsel %vm624, %v212, %v244
    %v765 = vsel %vm631, %v213, %v245
    %v766 = vsel %vm638, %v214, %v246
    %v767 = vsel %vm645, %v215, %v247
    %v768 = vsel %vm652, %v216, %v248
    %v769 = vsel %vm659, %v217, %v249
    %v770 = vsel %vm666, %v218, %v250
    %v771 = vsel %vm673, %v219, %v251
    %v772 = vsel %vm680, %v220, %v252
    %v773 = vsel %vm687, %v221, %v253
    %v774 = vsel %vm694, %v222, %v254
    %v775 = vsel %vm701, %v223, %v255
    %v776 = vsel %vm708, %v224, %v256
    %v777 = vsel %vm715, %v225, %v257
    %v778 = vsel %vm722, %v226, %v258
    %v779 = vsel %vm729, %v227, %v259
    %v780 = vsel %vm736, %v228, %v260
    %v781 = vsel %vm743, %v229, %v261
    %v782 = vsel %vm750, %v230, %v262
    %v783 = vld [vmem:[#allocation2] sm:$0xff]
    %v784 = vld [vmem:[#allocation2 + $0x8] sm:$0xff]
    %v785 = vld [vmem:[#allocation2 + $0x10] sm:$0xff]
    %v786 = vld [vmem:[#allocation2 + $0x18] sm:$0xff]
    %v787 = vld [vmem:[#allocation2 + $0x20] sm:$0xff]
    %v788 = vld [vmem:[#allocation2 + $0x28] sm:$0xff]
    %v789 = vld [vmem:[#allocation2 + $0x30] sm:$0xff]
    %v790 = vld [vmem:[#allocation2 + $0x38] sm:$0xff]
    %v791 = vld [vmem:[#allocation2 + $0x40] sm:$0xff]
    %v792 = vld [vmem:[#allocation2 + $0x48] sm:$0xff]
    %v793 = vld [vmem:[#allocation2 + $0x50] sm:$0xff]
    %v794 = vld [vmem:[#allocation2 + $0x58] sm:$0xff]
    %v795 = vld [vmem:[#allocation2 + $0x60] sm:$0xff]
    %v796 = vld [vmem:[#allocation2 + $0x68] sm:$0xff]
    %v797 = vld [vmem:[#allocation2 + $0x70] sm:$0xff]
    %v798 = vld [vmem:[#allocation2 + $0x78] sm:$0xff]
    %v799 = vld [vmem:[#allocation2 + $0x80] sm:$0xff]
    %v800 = vld [vmem:[#allocation2 + $0x88] sm:$0xff]
    %v801 = vld [vmem:[#allocation2 + $0x90] sm:$0xff]
    %v802 = vld [vmem:[#allocation2 + $0x98] sm:$0xff]
    %v803 = vld [vmem:[#allocation2 + $0xa0] sm:$0xff]
    %v804 = vld [vmem:[#allocation2 + $0xa8] sm:$0xff]
    %v805 = vld [vmem:[#allocation2 + $0xb0] sm:$0xff]
    %v806 = vld [vmem:[#allocation2 + $0xb8] sm:$0xff]
    %v807 = vld [vmem:[#allocation2 + $0xc0] sm:$0xff]
    %v808 = vld [vmem:[#allocation2 + $0xc8] sm:$0xff]
    %v809 = vld [vmem:[#allocation2 + $0xd0] sm:$0xff]
    %v810 = vld [vmem:[#allocation2 + $0xd8] sm:$0xff]
    %v811 = vld [vmem:[#allocation2 + $0xe0] sm:$0xff]
    %v812 = vld [vmem:[#allocation2 + $0xe8] sm:$0xff]
    %v813 = vld [vmem:[#allocation2 + $0xf0] sm:$0xff]
    %v814 = vld [vmem:[#allocation2 + $0xf8] sm:$0xff]
    %v815 = vld [vmem:[#allocation2 + $0x100] sm:$0xff]
    %v816 = vld [vmem:[#allocation2 + $0x108] sm:$0xff]
    %v817 = vld [vmem:[#allocation2 + $0x110] sm:$0xff]
    %v818 = vld [vmem:[#allocation2 + $0x118] sm:$0xff]
    %v819 = vld [vmem:[#allocation2 + $0x120] sm:$0xff]
    %v820 = vld [vmem:[#allocation2 + $0x128] sm:$0xff]
    %v821 = vld [vmem:[#allocation2 + $0x130] sm:$0xff]
    %v822 = vld [vmem:[#allocation2 + $0x138] sm:$0xff]
    %v823 = vld [vmem:[#allocation2 + $0x140] sm:$0xff]
    %v824 = vld [vmem:[#allocation2 + $0x148] sm:$0xff]
    %v825 = vld [vmem:[#allocation2 + $0x150] sm:$0xff]
    %v826 = vld [vmem:[#allocation2 + $0x158] sm:$0xff]
    %v827 = vld [vmem:[#allocation2 + $0x160] sm:$0xff]
    %v828 = vld [vmem:[#allocation2 + $0x168] sm:$0xff]
    %v829 = vld [vmem:[#allocation2 + $0x170] sm:$0xff]
    %v830 = vld [vmem:[#allocation2 + $0x178] sm:$0xff]
    %v831 = vld [vmem:[#allocation2 + $0x180] sm:$0xff]
    %v832 = vld [vmem:[#allocation2 + $0x188] sm:$0xff]
    %v833 = vld [vmem:[#allocation2 + $0x190] sm:$0xff]
    %v834 = vld [vmem:[#allocation2 + $0x198] sm:$0xff]
    %v835 = vld [vmem:[#allocation2 + $0x1a0] sm:$0xff]
    %v836 = vld [vmem:[#allocation2 + $0x1a8] sm:$0xff]
    %v837 = vld [vmem:[#allocation2 + $0x1b0] sm:$0xff]
    %v838 = vld [vmem:[#allocation2 + $0x1b8] sm:$0xff]
    %v839 = vld [vmem:[#allocation2 + $0x1c0] sm:$0xff]
    %v840 = vld [vmem:[#allocation2 + $0x1c8] sm:$0xff]
    %v841 = vld [vmem:[#allocation2 + $0x1d0] sm:$0xff]
    %v842 = vld [vmem:[#allocation2 + $0x1d8] sm:$0xff]
    %v843 = vld [vmem:[#allocation2 + $0x1e0] sm:$0xff]
    %v844 = vld [vmem:[#allocation2 + $0x1e8] sm:$0xff]
    %v845 = vld [vmem:[#allocation2 + $0x1f0] sm:$0xff]
    %v846 = vld [vmem:[#allocation2 + $0x1f8] sm:$0xff]
    %v847 = vpack.c.bf16 %v785, %v783
    %v848 = vpack.c.bf16 %v786, %v784
    %v849 = vpack.c.bf16 %v789, %v787
    %v850 = vpack.c.bf16 %v790, %v788
    %v851 = vpack.c.bf16 %v793, %v791
    %v852 = vpack.c.bf16 %v794, %v792
    %v853 = vpack.c.bf16 %v797, %v795
    %v854 = vpack.c.bf16 %v798, %v796
    %v855 = vpack.c.bf16 %v801, %v799
    %v856 = vpack.c.bf16 %v802, %v800
    %v857 = vpack.c.bf16 %v805, %v803
    %v858 = vpack.c.bf16 %v806, %v804
    %v859 = vpack.c.bf16 %v809, %v807
    %v860 = vpack.c.bf16 %v810, %v808
    %v861 = vpack.c.bf16 %v813, %v811
    %v862 = vpack.c.bf16 %v814, %v812
    %v863 = vpack.c.bf16 %v817, %v815
    %v864 = vpack.c.bf16 %v818, %v816
    %v865 = vpack.c.bf16 %v821, %v819
    %v866 = vpack.c.bf16 %v822, %v820
    %v867 = vpack.c.bf16 %v825, %v823
    %v868 = vpack.c.bf16 %v826, %v824
    %v869 = vpack.c.bf16 %v829, %v827
    %v870 = vpack.c.bf16 %v830, %v828
    %v871 = vpack.c.bf16 %v833, %v831
    %v872 = vpack.c.bf16 %v834, %v832
    %v873 = vpack.c.bf16 %v837, %v835
    %v874 = vpack.c.bf16 %v838, %v836
    %v875 = vpack.c.bf16 %v841, %v839
    %v876 = vpack.c.bf16 %v842, %v840
    %v877 = vpack.c.bf16 %v845, %v843
    %v878 = vpack.c.bf16 %v846, %v844
    %v911 = vunpack.c.l.b16 %v751
    %v912 = vunpack.c.l.b16 %v752
    %v913 = vunpack.c.l.b16 %v753
    %v914 = vunpack.c.l.b16 %v754
    %v915 = vunpack.c.l.b16 %v755
    %v916 = vunpack.c.l.b16 %v756
    %v917 = vunpack.c.l.b16 %v757
    %v918 = vunpack.c.l.b16 %v758
    %v919 = vunpack.c.l.b16 %v759
    %v920 = vunpack.c.l.b16 %v760
    %v921 = vunpack.c.l.b16 %v761
    %v922 = vunpack.c.l.b16 %v762
    %v923 = vunpack.c.l.b16 %v763
    %v924 = vunpack.c.l.b16 %v764
    %v925 = vunpack.c.l.b16 %v765
    %v926 = vunpack.c.l.b16 %v766
    %v927 = vunpack.c.l.b16 %v767
    %v928 = vunpack.c.l.b16 %v768
    %v929 = vunpack.c.l.b16 %v769
    %v930 = vunpack.c.l.b16 %v770
    %v931 = vunpack.c.l.b16 %v771
    %v932 = vunpack.c.l.b16 %v772
    %v933 = vunpack.c.l.b16 %v773
    %v934 = vunpack.c.l.b16 %v774
    %v935 = vunpack.c.l.b16 %v775
    %v936 = vunpack.c.l.b16 %v776
    %v937 = vunpack.c.l.b16 %v777
    %v938 = vunpack.c.l.b16 %v778
    %v939 = vunpack.c.l.b16 %v779
    %v940 = vunpack.c.l.b16 %v780
    %v941 = vunpack.c.l.b16 %v781
    %v942 = vunpack.c.l.b16 %v782
    %v943 = vpack.c.b16 %v912, %v911
    %v944 = vpack.c.b16 %v914, %v913
    %v945 = vpack.c.b16 %v916, %v915
    %v946 = vpack.c.b16 %v918, %v917
    %v947 = vpack.c.b16 %v920, %v919
    %v948 = vpack.c.b16 %v922, %v921
    %v949 = vpack.c.b16 %v924, %v923
    %v950 = vpack.c.b16 %v926, %v925
    %v951 = vpack.c.b16 %v928, %v927
    %v952 = vpack.c.b16 %v930, %v929
    %v953 = vpack.c.b16 %v932, %v931
    %v954 = vpack.c.b16 %v934, %v933
    %v955 = vpack.c.b16 %v936, %v935
    %v956 = vpack.c.b16 %v938, %v937
    %v957 = vpack.c.b16 %v940, %v939
    %v958 = vpack.c.b16 %v942, %v941
    %975 = vmatpush.bf16.msra.mxu0 %v950
    %976 = vmatpush.bf16.msra.mxu0 %v949
    %977 = vmatpush.bf16.msra.mxu0 %v948
    %978 = vmatpush.bf16.msra.mxu0 %v947
    %979 = vmatpush.bf16.msra.mxu0 %v946
    %980 = vmatpush.bf16.msra.mxu0 %v945
    %981 = vmatpush.bf16.msra.mxu0 %v944
    %982 = vmatpush.bf16.msra.mxu0 %v943
    %983 = vmatmul.bf16.gmra.mxu0 %v847
    %v984 = vpop.f32.mrf.mxu0
    %v985 = vadd.f32 0.0, %v984
    %v986 = vpop.f32.mrf.mxu0
    %v987 = vadd.f32 0.0, %v986
    %988 = vmatmul.bf16.gmra.mxu0 %v849
    %v989 = vpop.f32.mrf.mxu0
    %v990 = vadd.f32 0.0, %v989
    %v991 = vpop.f32.mrf.mxu0
    %v992 = vadd.f32 0.0, %v991
    %993 = vmatmul.bf16.gmra.mxu0 %v851
    %v994 = vpop.f32.mrf.mxu0
    %v995 = vadd.f32 0.0, %v994
    %v996 = vpop.f32.mrf.mxu0
    %v997 = vadd.f32 0.0, %v996
    %998 = vmatmul.bf16.gmra.mxu0 %v853
    %v999 = vpop.f32.mrf.mxu0
    %v1000 = vadd.f32 0.0, %v999
    %v1001 = vpop.f32.mrf.mxu0
    %v1002 = vadd.f32 0.0, %v1001
    %1003 = vmatmul.bf16.gmra.mxu0 %v855
    %v1004 = vpop.f32.mrf.mxu0
    %v1005 = vadd.f32 0.0, %v1004
    %v1006 = vpop.f32.mrf.mxu0
    %v1007 = vadd.f32 0.0, %v1006
    %1008 = vmatmul.bf16.gmra.mxu0 %v857
    %v1009 = vpop.f32.mrf.mxu0
    %v1010 = vadd.f32 0.0, %v1009
    %v1011 = vpop.f32.mrf.mxu0
    %v1012 = vadd.f32 0.0, %v1011
    %1013 = vmatmul.bf16.gmra.mxu0 %v859
    %v1014 = vpop.f32.mrf.mxu0
    %v1015 = vadd.f32 0.0, %v1014
    %v1016 = vpop.f32.mrf.mxu0
    %v1017 = vadd.f32 0.0, %v1016
    %1018 = vmatmul.bf16.gmra.mxu0 %v861
    %v1019 = vpop.f32.mrf.mxu0
    %v1020 = vadd.f32 0.0, %v1019
    %v1021 = vpop.f32.mrf.mxu0
    %v1022 = vadd.f32 0.0, %v1021
    %1023 = vmatmul.bf16.gmra.mxu0 %v863
    %v1024 = vpop.f32.mrf.mxu0
    %v1025 = vadd.f32 0.0, %v1024
    %v1026 = vpop.f32.mrf.mxu0
    %v1027 = vadd.f32 0.0, %v1026
    %1028 = vmatmul.bf16.gmra.mxu0 %v865
    %v1029 = vpop.f32.mrf.mxu0
    %v1030 = vadd.f32 0.0, %v1029
    %v1031 = vpop.f32.mrf.mxu0
    %v1032 = vadd.f32 0.0, %v1031
    %1033 = vmatmul.bf16.gmra.mxu0 %v867
    %v1034 = vpop.f32.mrf.mxu0
    %v1035 = vadd.f32 0.0, %v1034
    %v1036 = vpop.f32.mrf.mxu0
    %v1037 = vadd.f32 0.0, %v1036
    %1038 = vmatmul.bf16.gmra.mxu0 %v869
    %v1039 = vpop.f32.mrf.mxu0
    %v1040 = vadd.f32 0.0, %v1039
    %v1041 = vpop.f32.mrf.mxu0
    %v1042 = vadd.f32 0.0, %v1041
    %1043 = vmatmul.bf16.gmra.mxu0 %v871
    %v1044 = vpop.f32.mrf.mxu0
    %v1045 = vadd.f32 0.0, %v1044
    %v1046 = vpop.f32.mrf.mxu0
    %v1047 = vadd.f32 0.0, %v1046
    %1048 = vmatmul.bf16.gmra.mxu0 %v873
    %v1049 = vpop.f32.mrf.mxu0
    %v1050 = vadd.f32 0.0, %v1049
    %v1051 = vpop.f32.mrf.mxu0
    %v1052 = vadd.f32 0.0, %v1051
    %1053 = vmatmul.bf16.gmra.mxu0 %v875
    %v1054 = vpop.f32.mrf.mxu0
    %v1055 = vadd.f32 0.0, %v1054
    %v1056 = vpop.f32.mrf.mxu0
    %v1057 = vadd.f32 0.0, %v1056
    %1058 = vmatmul.bf16.gmra.mxu0 %v877
    %v1059 = vpop.f32.mrf.mxu0
    %v1060 = vadd.f32 0.0, %v1059
    %v1061 = vpop.f32.mrf.mxu0
    %v1062 = vadd.f32 0.0, %v1061
    %1063 = vdwg.mxu0
    %1064 = vmatpush.bf16.msra.mxu0 %v958
    %1065 = vmatpush.bf16.msra.mxu0 %v957
    %1066 = vmatpush.bf16.msra.mxu0 %v956
    %1067 = vmatpush.bf16.msra.mxu0 %v955
    %1068 = vmatpush.bf16.msra.mxu0 %v954
    %1069 = vmatpush.bf16.msra.mxu0 %v953
    %1070 = vmatpush.bf16.msra.mxu0 %v952
    %1071 = vmatpush.bf16.msra.mxu0 %v951
    %1072 = vmatmul.bf16.gmra.mxu0 %v848
    %v1073 = vpop.f32.mrf.mxu0
    %v1074 = vadd.f32 %v985, %v1073
    %v1075 = vpop.f32.mrf.mxu0
    %v1076 = vadd.f32 %v987, %v1075
    %1077 = vmatmul.bf16.gmra.mxu0 %v850
    %v1078 = vpop.f32.mrf.mxu0
    %v1079 = vadd.f32 %v990, %v1078
    %v1080 = vpop.f32.mrf.mxu0
    %v1081 = vadd.f32 %v992, %v1080
    %1082 = vmatmul.bf16.gmra.mxu0 %v852
    %v1083 = vpop.f32.mrf.mxu0
    %v1084 = vadd.f32 %v995, %v1083
    %v1085 = vpop.f32.mrf.mxu0
    %v1086 = vadd.f32 %v997, %v1085
    %1087 = vmatmul.bf16.gmra.mxu0 %v854
    %v1088 = vpop.f32.mrf.mxu0
    %v1089 = vadd.f32 %v1000, %v1088
    %v1090 = vpop.f32.mrf.mxu0
    %v1091 = vadd.f32 %v1002, %v1090
    %1092 = vmatmul.bf16.gmra.mxu0 %v856
    %v1093 = vpop.f32.mrf.mxu0
    %v1094 = vadd.f32 %v1005, %v1093
    %v1095 = vpop.f32.mrf.mxu0
    %v1096 = vadd.f32 %v1007, %v1095
    %1097 = vmatmul.bf16.gmra.mxu0 %v858
    %v1098 = vpop.f32.mrf.mxu0
    %v1099 = vadd.f32 %v1010, %v1098
    %v1100 = vpop.f32.mrf.mxu0
    %v1101 = vadd.f32 %v1012, %v1100
    %1102 = vmatmul.bf16.gmra.mxu0 %v860
    %v1103 = vpop.f32.mrf.mxu0
    %v1104 = vadd.f32 %v1015, %v1103
    %v1105 = vpop.f32.mrf.mxu0
    %v1106 = vadd.f32 %v1017, %v1105
    %1107 = vmatmul.bf16.gmra.mxu0 %v862
    %v1108 = vpop.f32.mrf.mxu0
    %v1109 = vadd.f32 %v1020, %v1108
    %v1110 = vpop.f32.mrf.mxu0
    %v1111 = vadd.f32 %v1022, %v1110
    %1112 = vmatmul.bf16.gmra.mxu0 %v864
    %v1113 = vpop.f32.mrf.mxu0
    %v1114 = vadd.f32 %v1025, %v1113
    %v1115 = vpop.f32.mrf.mxu0
    %v1116 = vadd.f32 %v1027, %v1115
    %1117 = vmatmul.bf16.gmra.mxu0 %v866
    %v1118 = vpop.f32.mrf.mxu0
    %v1119 = vadd.f32 %v1030, %v1118
    %v1120 = vpop.f32.mrf.mxu0
    %v1121 = vadd.f32 %v1032, %v1120
    %1122 = vmatmul.bf16.gmra.mxu0 %v868
    %v1123 = vpop.f32.mrf.mxu0
    %v1124 = vadd.f32 %v1035, %v1123
    %v1125 = vpop.f32.mrf.mxu0
    %v1126 = vadd.f32 %v1037, %v1125
    %1127 = vmatmul.bf16.gmra.mxu0 %v870
    %v1128 = vpop.f32.mrf.mxu0
    %v1129 = vadd.f32 %v1040, %v1128
    %v1130 = vpop.f32.mrf.mxu0
    %v1131 = vadd.f32 %v1042, %v1130
    %1132 = vmatmul.bf16.gmra.mxu0 %v872
    %v1133 = vpop.f32.mrf.mxu0
    %v1134 = vadd.f32 %v1045, %v1133
    %v1135 = vpop.f32.mrf.mxu0
    %v1136 = vadd.f32 %v1047, %v1135
    %1137 = vmatmul.bf16.gmra.mxu0 %v874
    %v1138 = vpop.f32.mrf.mxu0
    %v1139 = vadd.f32 %v1050, %v1138
    %v1140 = vpop.f32.mrf.mxu0
    %v1141 = vadd.f32 %v1052, %v1140
    %1142 = vmatmul.bf16.gmra.mxu0 %v876
    %v1143 = vpop.f32.mrf.mxu0
    %v1144 = vadd.f32 %v1055, %v1143
    %v1145 = vpop.f32.mrf.mxu0
    %v1146 = vadd.f32 %v1057, %v1145
    %1147 = vmatmul.bf16.gmra.mxu0 %v878
    %v1148 = vpop.f32.mrf.mxu0
    %v1149 = vadd.f32 %v1060, %v1148
    %v1150 = vpop.f32.mrf.mxu0
    %v1151 = vadd.f32 %v1062, %v1150
    %1152 = vdwg.mxu0
    %p1153 = scmp.eq.s32.totalorder 0, 0
    // Predicated region
    $region38: #{tpu_custom_call.1} parent=1 // pred_check
      %p1154 = pneg %p1153
    $region39: #{tpu_custom_call.1} parent=1 // pred_check_branch
      %1156 = sbr.rel (%p1154) target = $region41
    $region40: #{tpu_custom_call.1} parent=1 // pred_region
      %v1157 = vld [vmem:[%s4] sm:$0x1]
      %v1159 = vperm.slane %v1157, 0
      %v1161 = vadd.f32 %v1074, %v1159
      %v1162 = vadd.f32 %v1076, %v1159
      %v1163 = vadd.f32 %v1079, %v1159
      %v1164 = vadd.f32 %v1081, %v1159
      %v1165 = vadd.f32 %v1084, %v1159
      %v1166 = vadd.f32 %v1086, %v1159
      %v1167 = vadd.f32 %v1089, %v1159
      %v1168 = vadd.f32 %v1091, %v1159
      %v1169 = vadd.f32 %v1094, %v1159
      %v1170 = vadd.f32 %v1096, %v1159
      %v1171 = vadd.f32 %v1099, %v1159
      %v1172 = vadd.f32 %v1101, %v1159
      %v1173 = vadd.f32 %v1104, %v1159
      %v1174 = vadd.f32 %v1106, %v1159
      %v1175 = vadd.f32 %v1109, %v1159
      %v1176 = vadd.f32 %v1111, %v1159
      %v1177 = vadd.f32 %v1114, %v1159
      %v1178 = vadd.f32 %v1116, %v1159
      %v1179 = vadd.f32 %v1119, %v1159
      %v1180 = vadd.f32 %v1121, %v1159
      %v1181 = vadd.f32 %v1124, %v1159
      %v1182 = vadd.f32 %v1126, %v1159
      %v1183 = vadd.f32 %v1129, %v1159
      %v1184 = vadd.f32 %v1131, %v1159
      %v1185 = vadd.f32 %v1134, %v1159
      %v1186 = vadd.f32 %v1136, %v1159
      %v1187 = vadd.f32 %v1139, %v1159
      %v1188 = vadd.f32 %v1141, %v1159
      %v1189 = vadd.f32 %v1144, %v1159
      %v1190 = vadd.f32 %v1146, %v1159
      %v1191 = vadd.f32 %v1149, %v1159
      %v1192 = vadd.f32 %v1151, %v1159
      %1193 = vst [vmem:[#allocation10] sm:$0xff] %v1161
      %1194 = vst [vmem:[#allocation10 + $0x8] sm:$0xff] %v1162
      %1195 = vst [vmem:[#allocation10 + $0x10] sm:$0xff] %v1163
      %1196 = vst [vmem:[#allocation10 + $0x18] sm:$0xff] %v1164
      %1197 = vst [vmem:[#allocation10 + $0x20] sm:$0xff] %v1165
      %1198 = vst [vmem:[#allocation10 + $0x28] sm:$0xff] %v1166
      %1199 = vst [vmem:[#allocation10 + $0x30] sm:$0xff] %v1167
      %1200 = vst [vmem:[#allocation10 + $0x38] sm:$0xff] %v1168
      %1201 = vst [vmem:[#allocation10 + $0x40] sm:$0xff] %v1169
      %1202 = vst [vmem:[#allocation10 + $0x48] sm:$0xff] %v1170
      %1203 = vst [vmem:[#allocation10 + $0x50] sm:$0xff] %v1171
      %1204 = vst [vmem:[#allocation10 + $0x58] sm:$0xff] %v1172
      %1205 = vst [vmem:[#allocation10 + $0x60] sm:$0xff] %v1173
      %1206 = vst [vmem:[#allocation10 + $0x68] sm:$0xff] %v1174
      %1207 = vst [vmem:[#allocation10 + $0x70] sm:$0xff] %v1175
      %1208 = vst [vmem:[#allocation10 + $0x78] sm:$0xff] %v1176
      %1209 = vst [vmem:[#allocation10 + $0x80] sm:$0xff] %v1177
      %1210 = vst [vmem:[#allocation10 + $0x88] sm:$0xff] %v1178
      %1211 = vst [vmem:[#allocation10 + $0x90] sm:$0xff] %v1179
      %1212 = vst [vmem:[#allocation10 + $0x98] sm:$0xff] %v1180
      %1213 = vst [vmem:[#allocation10 + $0xa0] sm:$0xff] %v1181
      %1214 = vst [vmem:[#allocation10 + $0xa8] sm:$0xff] %v1182
      %1215 = vst [vmem:[#allocation10 + $0xb0] sm:$0xff] %v1183
      %1216 = vst [vmem:[#allocation10 + $0xb8] sm:$0xff] %v1184
      %1217 = vst [vmem:[#allocation10 + $0xc0] sm:$0xff] %v1185
      %1218 = vst [vmem:[#allocation10 + $0xc8] sm:$0xff] %v1186
      %1219 = vst [vmem:[#allocation10 + $0xd0] sm:$0xff] %v1187
      %1220 = vst [vmem:[#allocation10 + $0xd8] sm:$0xff] %v1188
      %1221 = vst [vmem:[#allocation10 + $0xe0] sm:$0xff] %v1189
      %1222 = vst [vmem:[#allocation10 + $0xe8] sm:$0xff] %v1190
      %1223 = vst [vmem:[#allocation10 + $0xf0] sm:$0xff] %v1191
      %1224 = vst [vmem:[#allocation10 + $0xf8] sm:$0xff] %v1192
    $region41: #{tpu_custom_call.1} parent=1 // pred_fallthru
      _
    %p1225 = scmp.ne.s32.totalorder 0, 0
    // Predicated region
    $region42: #{tpu_custom_call.1} parent=1 // pred_check
      %p1226 = pneg %p1225
    $region43: #{tpu_custom_call.1} parent=1 // pred_check_branch
      %1228 = sbr.rel (%p1226) target = $region45
    $region44: #{tpu_custom_call.1} parent=1 // pred_region
      %v1229 = vld [vmem:[#allocation10] sm:$0xff]
      %v1230 = vld [vmem:[#allocation10 + $0x8] sm:$0xff]
      %v1231 = vld [vmem:[#allocation10 + $0x10] sm:$0xff]
      %v1232 = vld [vmem:[#allocation10 + $0x18] sm:$0xff]
      %v1233 = vld [vmem:[#allocation10 + $0x20] sm:$0xff]
      %v1234 = vld [vmem:[#allocation10 + $0x28] sm:$0xff]
      %v1235 = vld [vmem:[#allocation10 + $0x30] sm:$0xff]
      %v1236 = vld [vmem:[#allocation10 + $0x38] sm:$0xff]
      %v1237 = vld [vmem:[#allocation10 + $0x40] sm:$0xff]
      %v1238 = vld [vmem:[#allocation10 + $0x48] sm:$0xff]
      %v1239 = vld [vmem:[#allocation10 + $0x50] sm:$0xff]
      %v1240 = vld [vmem:[#allocation10 + $0x58] sm:$0xff]
      %v1241 = vld [vmem:[#allocation10 + $0x60] sm:$0xff]
      %v1242 = vld [vmem:[#allocation10 + $0x68] sm:$0xff]
      %v1243 = vld [vmem:[#allocation10 + $0x70] sm:$0xff]
      %v1244 = vld [vmem:[#allocation10 + $0x78] sm:$0xff]
      %v1245 = vld [vmem:[#allocation10 + $0x80] sm:$0xff]
      %v1246 = vld [vmem:[#allocation10 + $0x88] sm:$0xff]
      %v1247 = vld [vmem:[#allocation10 + $0x90] sm:$0xff]
      %v1248 = vld [vmem:[#allocation10 + $0x98] sm:$0xff]
      %v1249 = vld [vmem:[#allocation10 + $0xa0] sm:$0xff]
      %v1250 = vld [vmem:[#allocation10 + $0xa8] sm:$0xff]
      %v1251 = vld [vmem:[#allocation10 + $0xb0] sm:$0xff]
      %v1252 = vld [vmem:[#allocation10 + $0xb8] sm:$0xff]
      %v1253 = vld [vmem:[#allocation10 + $0xc0] sm:$0xff]
      %v1254 = vld [vmem:[#allocation10 + $0xc8] sm:$0xff]
      %v1255 = vld [vmem:[#allocation10 + $0xd0] sm:$0xff]
      %v1256 = vld [vmem:[#allocation10 + $0xd8] sm:$0xff]
      %v1257 = vld [vmem:[#allocation10 + $0xe0] sm:$0xff]
      %v1258 = vld [vmem:[#allocation10 + $0xe8] sm:$0xff]
      %v1259 = vld [vmem:[#allocation10 + $0xf0] sm:$0xff]
      %v1260 = vld [vmem:[#allocation10 + $0xf8] sm:$0xff]
      %v1261 = vadd.f32 %v1229, %v1074
      %v1262 = vadd.f32 %v1230, %v1076
      %v1263 = vadd.f32 %v1231, %v1079
      %v1264 = vadd.f32 %v1232, %v1081
      %v1265 = vadd.f32 %v1233, %v1084
      %v1266 = vadd.f32 %v1234, %v1086
      %v1267 = vadd.f32 %v1235, %v1089
      %v1268 = vadd.f32 %v1236, %v1091
      %v1269 = vadd.f32 %v1237, %v1094
      %v1270 = vadd.f32 %v1238, %v1096
      %v1271 = vadd.f32 %v1239, %v1099
      %v1272 = vadd.f32 %v1240, %v1101
      %v1273 = vadd.f32 %v1241, %v1104
      %v1274 = vadd.f32 %v1242, %v1106
      %v1275 = vadd.f32 %v1243, %v1109
      %v1276 = vadd.f32 %v1244, %v1111
      %v1277 = vadd.f32 %v1245, %v1114
      %v1278 = vadd.f32 %v1246, %v1116
      %v1279 = vadd.f32 %v1247, %v1119
      %v1280 = vadd.f32 %v1248, %v1121
      %v1281 = vadd.f32 %v1249, %v1124
      %v1282 = vadd.f32 %v1250, %v1126
      %v1283 = vadd.f32 %v1251, %v1129
      %v1284 = vadd.f32 %v1252, %v1131
      %v1285 = vadd.f32 %v1253, %v1134
      %v1286 = vadd.f32 %v1254, %v1136
      %v1287 = vadd.f32 %v1255, %v1139
      %v1288 = vadd.f32 %v1256, %v1141
      %v1289 = vadd.f32 %v1257, %v1144
      %v1290 = vadd.f32 %v1258, %v1146
      %v1291 = vadd.f32 %v1259, %v1149
      %v1292 = vadd.f32 %v1260, %v1151
      %1293 = vst [vmem:[#allocation10] sm:$0xff] %v1261
      %1294 = vst [vmem:[#allocation10 + $0x8] sm:$0xff] %v1262
      %1295 = vst [vmem:[#allocation10 + $0x10] sm:$0xff] %v1263
      %1296 = vst [vmem:[#allocation10 + $0x18] sm:$0xff] %v1264
      %1297 = vst [vmem:[#allocation10 + $0x20] sm:$0xff] %v1265
      %1298 = vst [vmem:[#allocation10 + $0x28] sm:$0xff] %v1266
      %1299 = vst [vmem:[#allocation10 + $0x30] sm:$0xff] %v1267
      %1300 = vst [vmem:[#allocation10 + $0x38] sm:$0xff] %v1268
      %1301 = vst [vmem:[#allocation10 + $0x40] sm:$0xff] %v1269
      %1302 = vst [vmem:[#allocation10 + $0x48] sm:$0xff] %v1270
      %1303 = vst [vmem:[#allocation10 + $0x50] sm:$0xff] %v1271
      %1304 = vst [vmem:[#allocation10 + $0x58] sm:$0xff] %v1272
      %1305 = vst [vmem:[#allocation10 + $0x60] sm:$0xff] %v1273
      %1306 = vst [vmem:[#allocation10 + $0x68] sm:$0xff] %v1274
      %1307 = vst [vmem:[#allocation10 + $0x70] sm:$0xff] %v1275
      %1308 = vst [vmem:[#allocation10 + $0x78] sm:$0xff] %v1276
      %1309 = vst [vmem:[#allocation10 + $0x80] sm:$0xff] %v1277
      %1310 = vst [vmem:[#allocation10 + $0x88] sm:$0xff] %v1278
      %1311 = vst [vmem:[#allocation10 + $0x90] sm:$0xff] %v1279
      %1312 = vst [vmem:[#allocation10 + $0x98] sm:$0xff] %v1280
      %1313 = vst [vmem:[#allocation10 + $0xa0] sm:$0xff] %v1281
      %1314 = vst [vmem:[#allocation10 + $0xa8] sm:$0xff] %v1282
      %1315 = vst [vmem:[#allocation10 + $0xb0] sm:$0xff] %v1283
      %1316 = vst [vmem:[#allocation10 + $0xb8] sm:$0xff] %v1284
      %1317 = vst [vmem:[#allocation10 + $0xc0] sm:$0xff] %v1285
      %1318 = vst [vmem:[#allocation10 + $0xc8] sm:$0xff] %v1286
      %1319 = vst [vmem:[#allocation10 + $0xd0] sm:$0xff] %v1287
      %1320 = vst [vmem:[#allocation10 + $0xd8] sm:$0xff] %v1288
      %1321 = vst [vmem:[#allocation10 + $0xe0] sm:$0xff] %v1289
      %1322 = vst [vmem:[#allocation10 + $0xe8] sm:$0xff] %v1290
      %1323 = vst [vmem:[#allocation10 + $0xf0] sm:$0xff] %v1291
      %1324 = vst [vmem:[#allocation10 + $0xf8] sm:$0xff] %v1292
    $region45: #{tpu_custom_call.1} parent=1 // pred_fallthru
      _
    // Predicated region
    $region46: #{tpu_custom_call.1} parent=1 // pred_check
      _
    $region47: #{tpu_custom_call.1} parent=1 // pred_check_branch
      %1326 = sbr.rel (0) target = $region49
    $region48: #{tpu_custom_call.1} parent=1 // pred_region
      %1328 = vsyncadd [#allocation4], 0
      %s1329 = sshll.u32 [#allocation10], 4
      %s1330 = int_to_ptr.vmem [resolvable:$true] %s1329
      %s1331 = sshll.u32 %s5, 4
      %s1332 = int_to_ptr.hbm [resolvable:$true] %s1331
      %1337 = dma.vmem_to_hbm [thread:$0]  %s1330, 4096, %s1332, [#allocation4], 128, 128, 8
    $region49: #{tpu_custom_call.1} parent=1 // pred_fallthru
      _
    // Predicated region
    $region50: #{tpu_custom_call.1} parent=1 // pred_check
      _
    $region51: #{tpu_custom_call.1} parent=1 // pred_check_branch
      %1339 = sbr.rel (0) target = $region53
    $region52: #{tpu_custom_call.1} parent=1 // pred_region
      %1341 = dma.done [#allocation4], 4096
    $region53: #{tpu_custom_call.1} parent=1 // pred_fallthru
      _
    %1342 = vsyncpa [#allocation3], 1
    %1343 = vsyncpa [#allocation6], 1
    %1344 = vsyncpa [#allocation9], 1
    %1345 = vsyncpa [#allocation4], 1

</llo_original>
